<compile_context>
chip_gen: v6e
topology: v6e:2x2x1
jax: 0.10.0
libtpu: 0.0.40
codegen_flags: <defaults>
</compile_context>

<pallas_src>
import functools

import jax
import jax.numpy as jnp
from jax.experimental import pallas as pl
from jax.experimental.pallas import tpu as pltpu


H1, H2, ENC = 256, 256, 512   # MLP hidden dims / enc_size from the module
MAX_TILE_B = 2048             # batch-tile cap (review: sweep 1024-4096); ~14 MiB live VMEM


def _round_up(n, m):
    return ((n + m - 1) // m) * m


def _cdiv(a, b):
    return -(-a // b)


def actor_critic_kernel(x_ref,
                        w1_ref, b1_ref,
                        w2_ref, b2_ref,
                        w3_ref, b3_ref,
                        wh_ref, bh_ref,
                        out_ref):
    # Cast the activation side to bf16 so each jnp.dot is a native bf16 x bf16 MXU
    # matmul (weights are already bf16 in VMEM); accumulate in f32.
    x = x_ref[...].astype(jnp.bfloat16)

    # enc: Linear -> Tanh -> Linear -> Tanh -> Linear -> Tanh  (MLP act=True)
    # tanh in bf16: its output is exactly the bf16 operand the next matmul needs.
    h1 = jnp.tanh((jnp.dot(x, w1_ref[...], preferred_element_type=jnp.float32)
                   + b1_ref[...]).astype(jnp.bfloat16))
    h2 = jnp.tanh((jnp.dot(h1, w2_ref[...], preferred_element_type=jnp.float32)
                   + b2_ref[...]).astype(jnp.bfloat16))
    z = jnp.tanh((jnp.dot(h2, w3_ref[...], preferred_element_type=jnp.float32)
                  + b3_ref[...]).astype(jnp.bfloat16))

    # fused (actor || value || zero-pad) head -> one lane-dense [TILE_B, N_PAD] store
    out_ref[...] = (
        jnp.dot(z, wh_ref[...], preferred_element_type=jnp.float32) + bh_ref[...]
    ).astype(out_ref.dtype)


@functools.partial(jax.jit, static_argnames=("n_actions",))
def actor_critic_forward(x, params, *, n_actions):
    B, D_in = x.shape
    d_pad = params["w1"].shape[0]             # round_up(D_in, 128)  (zero-padded rows)
    n_pad = params["wh"].shape[1]             # round_up(n_actions + 1, 128)

    # --- batch tiling ---------------------------------------------------------
    # * at least 2 grid steps when B >= 16 so v7x's 2 TensorCores both get work;
    # * tile derived from B (not vice versa) so padding is at most 7 rows per tile;
    # * tile capped at MAX_TILE_B to bound VMEM and keep the pipeline deep.
    min_tiles = 2 if B >= 16 else 1
    n_tiles = max(_cdiv(B, MAX_TILE_B), min_tiles)
    tile_b = _round_up(_cdiv(B, n_tiles), 8)
    b_pad = n_tiles * tile_b
    grid = (n_tiles,)

    # Pad batch rows and feature columns (zero features hit zero weight rows).
    x = jnp.pad(x, ((0, b_pad - B), (0, d_pad - D_in)))

    row_spec = lambda shape: pl.BlockSpec(shape, lambda i: (i, 0))   # tiled over batch
    res_spec = lambda shape: pl.BlockSpec(shape, lambda i: (0, 0))   # resident (weights)

    in_specs = [
        row_spec((tile_b, d_pad)),            # x
        res_spec((d_pad, H1)), res_spec((1, H1)),
        res_spec((H1, H2)),    res_spec((1, H2)),
        res_spec((H2, ENC)),   res_spec((1, ENC)),
        res_spec((ENC, n_pad)), res_spec((1, n_pad)),
    ]
    out_spec = row_spec((tile_b, n_pad))

    weight_bytes = sum(int(params[k].size) * params[k].dtype.itemsize
                       for k in ("w1", "b1", "w2", "b2", "w3", "b3", "wh", "bh"))
    cost = pl.CostEstimate(
        flops=2 * b_pad * (d_pad * H1 + H1 * H2 + H2 * ENC + ENC * n_pad),
        transcendentals=b_pad * (H1 + H2 + ENC),
        bytes_accessed=weight_bytes + b_pad * d_pad * 4 + b_pad * n_pad * 4,
    )

    fused = pl.pallas_call(
        actor_critic_kernel,
        out_shape=jax.ShapeDtypeStruct((b_pad, n_pad), jnp.float32),
        grid=grid,
        in_specs=in_specs,
        out_specs=out_spec,
        compiler_params=pltpu.CompilerParams(
            dimension_semantics=("parallel",),
            # 48 MiB: above v5e's 16 MiB default (needed once tile_b > ~1024),
            # below v7x's 64 MiB physical VMEM.
            vmem_limit_bytes=48 * 1024 * 1024,
        ),
        cost_estimate=cost,
    )(x,
      params["w1"], params["b1"],
      params["w2"], params["b2"],
      params["w3"], params["b3"],
      params["wh"], params["bh"])

    logits = fused[:B, :n_actions]
    value = fused[:B, n_actions:n_actions + 1]
    return logits, value


def _orthogonal_linear(key, in_dim, out_dim, gain):
    """Mimic torch nn.init.orthogonal_(weight, gain) + zero bias.

    Torch weight is [out, in]; we store it transposed as [in, out] so the
    kernel can compute x @ W + b.  Bias is kept 2-D [1, out] for TPU layout.
    """
    w_torch_layout = jax.nn.initializers.orthogonal(scale=gain)(
        key, (out_dim, in_dim), jnp.float32)
    w = jnp.transpose(w_torch_layout)          # [in, out]
    b = jnp.zeros((1, out_dim), jnp.float32)
    return w, b


def init_actor_critic_params(key, input_dim, n_actions):
    keys = jax.random.split(key, 5)
    gain_body = jnp.sqrt(2.0)   # _init_params default val = sqrt(2)
    gain_head = 0.1             # _init_params(module=action_head, val=0.1)

    w1, b1 = _orthogonal_linear(keys[0], input_dim, H1, gain_body)
    w2, b2 = _orthogonal_linear(keys[1], H1, H2, gain_body)
    w3, b3 = _orthogonal_linear(keys[2], H2, ENC, gain_body)
    wa, ba = _orthogonal_linear(keys[3], ENC, n_actions, gain_head)
    wv, bv = _orthogonal_linear(keys[4], ENC, 1, gain_body)

    # Pad D_in up to a lane multiple (128): first-layer operand / x tile become
    # lane-dense; the extra weight rows are zero so the math is unchanged.
    d_pad = _round_up(input_dim, 128)
    w1 = jnp.zeros((d_pad, H1), jnp.float32).at[:input_dim, :].set(w1)

    # Fuse heads: [512, n_actions+1] zero-padded on the lane axis to a 128 multiple.
    n_pad = _round_up(n_actions + 1, 128)
    wh = jnp.zeros((ENC, n_pad), jnp.float32).at[:, :n_actions].set(wa)
    wh = wh.at[:, n_actions:n_actions + 1].set(wv)
    bh = jnp.zeros((1, n_pad), jnp.float32).at[:, :n_actions].set(ba)
    bh = bh.at[:, n_actions:n_actions + 1].set(bv)

    # Weight matrices in bf16 (native MXU dtype, halves HBM traffic); biases stay f32.
    return dict(
        w1=w1.astype(jnp.bfloat16), b1=b1,
        w2=w2.astype(jnp.bfloat16), b2=b2,
        w3=w3.astype(jnp.bfloat16), b3=b3,
        wh=wh.astype(jnp.bfloat16), bh=bh,
    )


def reference_forward(x, p, n_actions):
    """f32-math reference using the same (bf16-stored) weights."""
    d_in = x.shape[1]
    w1 = p["w1"].astype(jnp.float32)[:d_in, :]   # drop zero padding rows
    h1 = jnp.tanh(x @ w1 + p["b1"])
    h2 = jnp.tanh(h1 @ p["w2"].astype(jnp.float32) + p["b2"])
    z = jnp.tanh(h2 @ p["w3"].astype(jnp.float32) + p["b3"])
    fused = z @ p["wh"].astype(jnp.float32) + p["bh"]
    return fused[:, :n_actions], fused[:, n_actions:n_actions + 1]


if __name__ == "__main__":
    B, D_IN, N_ACTIONS = 2, 16, 6

    key = jax.random.PRNGKey(0)
    k_param, k_x = jax.random.split(key)
    params = init_actor_critic_params(k_param, D_IN, N_ACTIONS)
    x = jax.random.normal(k_x, (B, D_IN), jnp.float32)

    logits, value = actor_critic_forward(x, params, n_actions=N_ACTIONS)
    jax.block_until_ready((logits, value))

    ref_logits, ref_value = reference_forward(x, params, N_ACTIONS)
    assert logits.shape == (B, N_ACTIONS) and value.shape == (B, 1)
    # Kernel runs bf16 activations / bf16 tanh, reference runs f32 math on the
    # same bf16 weights -> tolerances loosened accordingly (see review notes).
    assert jnp.allclose(logits, ref_logits, atol=2e-2, rtol=2e-2)
    assert jnp.allclose(value, ref_value, atol=2e-2, rtol=2e-2)

    print("KERNEL_OK")
</pallas_src>

<mosaic_0001>
module attributes {stable_mosaic.version = 11 : i64} {
  func.func @actor_critic_kernel(%arg0: i32, %arg1: memref<8x128xf32, #tpu.memory_space<vmem>>, %arg2: memref<128x256xbf16, #tpu.memory_space<vmem>>, %arg3: memref<1x256xf32, #tpu.memory_space<vmem>>, %arg4: memref<256x256xbf16, #tpu.memory_space<vmem>>, %arg5: memref<1x256xf32, #tpu.memory_space<vmem>>, %arg6: memref<256x512xbf16, #tpu.memory_space<vmem>>, %arg7: memref<1x512xf32, #tpu.memory_space<vmem>>, %arg8: memref<512x128xbf16, #tpu.memory_space<vmem>>, %arg9: memref<1x128xf32, #tpu.memory_space<vmem>>, %arg10: memref<8x128xf32, #tpu.memory_space<vmem>>) attributes {dimension_semantics = [#tpu.dimension_semantics<parallel>], iteration_bounds = array<i64: 1>, scalar_prefetch = 0 : i64, scratch_operands = 0 : i64, tpu.core_type = #tpu.core_type<tc>, window_params = [{transform_indices = @transform_0, window_bounds = array<i64: 8, 128>}, {pipeline_mode = #tpu.pipeline_mode<synchronous>, transform_indices = @transform_1, window_bounds = array<i64: 128, 256>}, {pipeline_mode = #tpu.pipeline_mode<synchronous>, transform_indices = @transform_2, window_bounds = array<i64: 1, 256>}, {pipeline_mode = #tpu.pipeline_mode<synchronous>, transform_indices = @transform_3, window_bounds = array<i64: 256, 256>}, {pipeline_mode = #tpu.pipeline_mode<synchronous>, transform_indices = @transform_4, window_bounds = array<i64: 1, 256>}, {pipeline_mode = #tpu.pipeline_mode<synchronous>, transform_indices = @transform_5, window_bounds = array<i64: 256, 512>}, {pipeline_mode = #tpu.pipeline_mode<synchronous>, transform_indices = @transform_6, window_bounds = array<i64: 1, 512>}, {pipeline_mode = #tpu.pipeline_mode<synchronous>, transform_indices = @transform_7, window_bounds = array<i64: 512, 128>}, {pipeline_mode = #tpu.pipeline_mode<synchronous>, transform_indices = @transform_8, window_bounds = array<i64: 1, 128>}, {transform_indices = @transform_9, window_bounds = array<i64: 8, 128>}]} {
    %c0 = arith.constant 0 : index
    %c0_0 = arith.constant 0 : index
    %0 = vector.load %arg1[%c0, %c0_0] : memref<8x128xf32, #tpu.memory_space<vmem>>, vector<8x128xf32>
    %1 = arith.truncf %0 : vector<8x128xf32> to vector<8x128xbf16>
    %c0_1 = arith.constant 0 : index
    %c0_2 = arith.constant 0 : index
    %2 = vector.load %arg2[%c0_1, %c0_2] : memref<128x256xbf16, #tpu.memory_space<vmem>>, vector<128x256xbf16>
    %cst = arith.constant dense<0.000000e+00> : vector<8x256xf32>
    %3 = tpu.matmul %1, %2, %cst {dimension_numbers = #tpu.dot_dimension_numbers<[1], [0], [0], [1], [0, 0, 1, 1], [], []>} : vector<8x128xbf16>, vector<128x256xbf16>, vector<8x256xf32> -> vector<8x256xf32>
    %c0_3 = arith.constant 0 : index
    %c0_4 = arith.constant 0 : index
    %4 = vector.load %arg3[%c0_3, %c0_4] : memref<1x256xf32, #tpu.memory_space<vmem>>, vector<1x256xf32>
    %5 = vector.broadcast %4 : vector<1x256xf32> to vector<8x256xf32>
    %6 = arith.addf %3, %5 : vector<8x256xf32>
    %7 = arith.truncf %6 : vector<8x256xf32> to vector<8x256xbf16>
    %8 = math.tanh %7 : vector<8x256xbf16>
    %c0_5 = arith.constant 0 : index
    %c0_6 = arith.constant 0 : index
    %9 = vector.load %arg4[%c0_5, %c0_6] : memref<256x256xbf16, #tpu.memory_space<vmem>>, vector<256x256xbf16>
    %cst_7 = arith.constant dense<0.000000e+00> : vector<8x256xf32>
    %10 = tpu.matmul %8, %9, %cst_7 {dimension_numbers = #tpu.dot_dimension_numbers<[1], [0], [0], [1], [0, 0, 1, 1], [], []>} : vector<8x256xbf16>, vector<256x256xbf16>, vector<8x256xf32> -> vector<8x256xf32>
    %c0_8 = arith.constant 0 : index
    %c0_9 = arith.constant 0 : index
    %11 = vector.load %arg5[%c0_8, %c0_9] : memref<1x256xf32, #tpu.memory_space<vmem>>, vector<1x256xf32>
    %12 = vector.broadcast %11 : vector<1x256xf32> to vector<8x256xf32>
    %13 = arith.addf %10, %12 : vector<8x256xf32>
    %14 = arith.truncf %13 : vector<8x256xf32> to vector<8x256xbf16>
    %15 = math.tanh %14 : vector<8x256xbf16>
    %c0_10 = arith.constant 0 : index
    %c0_11 = arith.constant 0 : index
    %16 = vector.load %arg6[%c0_10, %c0_11] : memref<256x512xbf16, #tpu.memory_space<vmem>>, vector<256x512xbf16>
    %cst_12 = arith.constant dense<0.000000e+00> : vector<8x512xf32>
    %17 = tpu.matmul %15, %16, %cst_12 {dimension_numbers = #tpu.dot_dimension_numbers<[1], [0], [0], [1], [0, 0, 1, 1], [], []>} : vector<8x256xbf16>, vector<256x512xbf16>, vector<8x512xf32> -> vector<8x512xf32>
    %c0_13 = arith.constant 0 : index
    %c0_14 = arith.constant 0 : index
    %18 = vector.load %arg7[%c0_13, %c0_14] : memref<1x512xf32, #tpu.memory_space<vmem>>, vector<1x512xf32>
    %19 = vector.broadcast %18 : vector<1x512xf32> to vector<8x512xf32>
    %20 = arith.addf %17, %19 : vector<8x512xf32>
    %21 = arith.truncf %20 : vector<8x512xf32> to vector<8x512xbf16>
    %22 = math.tanh %21 : vector<8x512xbf16>
    %c0_15 = arith.constant 0 : index
    %c0_16 = arith.constant 0 : index
    %23 = vector.load %arg8[%c0_15, %c0_16] : memref<512x128xbf16, #tpu.memory_space<vmem>>, vector<512x128xbf16>
    %cst_17 = arith.constant dense<0.000000e+00> : vector<8x128xf32>
    %24 = tpu.matmul %22, %23, %cst_17 {dimension_numbers = #tpu.dot_dimension_numbers<[1], [0], [0], [1], [0, 0, 1, 1], [], []>} : vector<8x512xbf16>, vector<512x128xbf16>, vector<8x128xf32> -> vector<8x128xf32>
    %c0_18 = arith.constant 0 : index
    %c0_19 = arith.constant 0 : index
    %25 = vector.load %arg9[%c0_18, %c0_19] : memref<1x128xf32, #tpu.memory_space<vmem>>, vector<1x128xf32>
    %26 = vector.broadcast %25 : vector<1x128xf32> to vector<8x128xf32>
    %27 = arith.addf %24, %26 : vector<8x128xf32>
    %c0_20 = arith.constant 0 : index
    %c0_21 = arith.constant 0 : index
    %28 = vector.load %arg10[%c0_20, %c0_21] : memref<8x128xf32, #tpu.memory_space<vmem>>, vector<8x128xf32>
    tpu.vector_store %arg10[%c0_20, %c0_21], %27 {strides = array<i32>} : memref<8x128xf32, #tpu.memory_space<vmem>>, vector<8x128xf32>,
    return
  }
  func.func @transform_0(%arg0: i32) -> (i32, i32) {
    %c0_i32 = arith.constant 0 : i32
    %c0_i32_0 = arith.constant 0 : i32
    return %arg0, %c0_i32 : i32, i32
  }
  func.func @transform_1(%arg0: i32) -> (i32, i32) {
    %c0_i32 = arith.constant 0 : i32
    %c0_i32_0 = arith.constant 0 : i32
    %c0_i32_1 = arith.constant 0 : i32
    return %c0_i32, %c0_i32_0 : i32, i32
  }
  func.func @transform_2(%arg0: i32) -> (i32, i32) {
    %c0_i32 = arith.constant 0 : i32
    %c0_i32_0 = arith.constant 0 : i32
    %c0_i32_1 = arith.constant 0 : i32
    return %c0_i32, %c0_i32_0 : i32, i32
  }
  func.func @transform_3(%arg0: i32) -> (i32, i32) {
    %c0_i32 = arith.constant 0 : i32
    %c0_i32_0 = arith.constant 0 : i32
    %c0_i32_1 = arith.constant 0 : i32
    return %c0_i32, %c0_i32_0 : i32, i32
  }
  func.func @transform_4(%arg0: i32) -> (i32, i32) {
    %c0_i32 = arith.constant 0 : i32
    %c0_i32_0 = arith.constant 0 : i32
    %c0_i32_1 = arith.constant 0 : i32
    return %c0_i32, %c0_i32_0 : i32, i32
  }
  func.func @transform_5(%arg0: i32) -> (i32, i32) {
    %c0_i32 = arith.constant 0 : i32
    %c0_i32_0 = arith.constant 0 : i32
    %c0_i32_1 = arith.constant 0 : i32
    return %c0_i32, %c0_i32_0 : i32, i32
  }
  func.func @transform_6(%arg0: i32) -> (i32, i32) {
    %c0_i32 = arith.constant 0 : i32
    %c0_i32_0 = arith.constant 0 : i32
    %c0_i32_1 = arith.constant 0 : i32
    return %c0_i32, %c0_i32_0 : i32, i32
  }
  func.func @transform_7(%arg0: i32) -> (i32, i32) {
    %c0_i32 = arith.constant 0 : i32
    %c0_i32_0 = arith.constant 0 : i32
    %c0_i32_1 = arith.constant 0 : i32
    return %c0_i32, %c0_i32_0 : i32, i32
  }
  func.func @transform_8(%arg0: i32) -> (i32, i32) {
    %c0_i32 = arith.constant 0 : i32
    %c0_i32_0 = arith.constant 0 : i32
    %c0_i32_1 = arith.constant 0 : i32
    return %c0_i32, %c0_i32_0 : i32, i32
  }
  func.func @transform_9(%arg0: i32) -> (i32, i32) {
    %c0_i32 = arith.constant 0 : i32
    %c0_i32_0 = arith.constant 0 : i32
    return %arg0, %c0_i32 : i32, i32
  }
}

</mosaic_0001>

<llo_original>
// kernel: actor_critic_forward.1
$region0: #{actor_critic_forward.1}
  #allocation0 [shape = 'u32[]', space=smem, size = 0x4, offset = 0x4, fixed_abs, tag = 'smem constant byte address 0x4 - core index']
  #allocation1 [shape = 'u32[144,128]{1,0:T(1,128)}', space=vmem, size = 0x12000, scoped, tag = 'internal scratch']
  %s0 = inlined_call_operand.vmem [shape: f32[8,128], index: 0, kind: input, shape index: {}]
  %s1 = inlined_call_operand.hbm [shape: bf16[128,256], index: 1, kind: input, shape index: {}]
  %s2 = inlined_call_operand.vmem [shape: f32[1,256], index: 2, kind: input, shape index: {}]
  %s3 = inlined_call_operand.hbm [shape: bf16[256,256], index: 3, kind: input, shape index: {}]
  %s4 = inlined_call_operand.vmem [shape: f32[1,256], index: 4, kind: input, shape index: {}]
  %s5 = inlined_call_operand.hbm [shape: bf16[256,512], index: 5, kind: input, shape index: {}]
  %s6 = inlined_call_operand.vmem [shape: f32[1,512], index: 6, kind: input, shape index: {}]
  %s7 = inlined_call_operand.hbm [shape: bf16[512,128], index: 7, kind: input, shape index: {}]
  %s8 = inlined_call_operand.vmem [shape: f32[1,128], index: 8, kind: input, shape index: {}]
  %s9 = inlined_call_operand.vmem [shape: f32[8,128], index: 9, kind: output, shape index: {}]
  %s10 = sld [smem:[#allocation0]]
  $region62: #{actor_critic_forward.1} parent=0
    _
  %s12 = ssub.s32 1, %s10
  %s13 = scalar_select 0, %s12, %s10
  $region1: #{actor_critic_forward.1} parent=0
    #allocation2 [shape = 'u8[65536]{0}', space=vmem, size = 0x10000, scoped, tag = 'input window, operand 1, single buffered']
    #allocation3 [shape = 's32[1]{0}', space=sflag, size = 0x4, scoped, tag = 'scoped memory for actor_critic_forward.1']
    #allocation4 [shape = 'u8[131072]{0}', space=vmem, size = 0x20000, scoped, tag = 'input window, operand 3, single buffered']
    #allocation5 [shape = 's32[1]{0}', space=sflag, size = 0x4, scoped, tag = 'scoped memory for actor_critic_forward.1']
    #allocation6 [shape = 'u8[262144]{0}', space=vmem, size = 0x40000, scoped, tag = 'input window, operand 5, single buffered']
    #allocation7 [shape = 'u8[131072]{0}', space=vmem, size = 0x20000, scoped, tag = 'input window, operand 7, single buffered']
    #allocation8 [shape = 's32[1]{0}', space=sflag, size = 0x4, scoped, tag = 'scoped memory for actor_critic_forward.1']
    %14 = vsyncpa [#allocation3], 0
    %15 = vsyncpa [#allocation5], 0
    %16 = vsyncpa [#allocation8], 0
    // Predicated region
    $region2: #{actor_critic_forward.1} parent=1 // pred_check
      _
    $region3: #{actor_critic_forward.1} parent=1 // pred_check_branch
      %18 = sbr.rel (0) target = $region5
    $region4: #{actor_critic_forward.1} parent=1 // pred_region
      _
    $region5: #{actor_critic_forward.1} parent=1 // pred_fallthru
      _
    // Predicated region
    $region6: #{actor_critic_forward.1} parent=1 // pred_check
      _
    $region7: #{actor_critic_forward.1} parent=1 // pred_check_branch
      %20 = sbr.rel (0) target = $region9
    $region8: #{actor_critic_forward.1} parent=1 // pred_region
      %s22 = ssub.s32 2048, 2048
      %23 = vsyncadd [#allocation3], %s22
      %s24 = sshll.u32 [#allocation2], 4
      %s25 = int_to_ptr.vmem [resolvable:$true] %s24
      %30 = dma.hbm_to_vmem [thread:$0]  %s1, 2048, %s25, [#allocation3], 128, 128, 8
    $region9: #{actor_critic_forward.1} parent=1 // pred_fallthru
      _
    // Predicated region
    $region10: #{actor_critic_forward.1} parent=1 // pred_check
      _
    $region11: #{actor_critic_forward.1} parent=1 // pred_check_branch
      %32 = sbr.rel (0) target = $region13
    $region12: #{actor_critic_forward.1} parent=1 // pred_region
      _
    $region13: #{actor_critic_forward.1} parent=1 // pred_fallthru
      _
    // Predicated region
    $region14: #{actor_critic_forward.1} parent=1 // pred_check
      _
    $region15: #{actor_critic_forward.1} parent=1 // pred_check_branch
      %34 = sbr.rel (0) target = $region17
    $region16: #{actor_critic_forward.1} parent=1 // pred_region
      %s36 = ssub.s32 4096, 4096
      %37 = vsyncadd [#allocation5], %s36
      %s38 = sshll.u32 [#allocation4], 4
      %s39 = int_to_ptr.vmem [resolvable:$true] %s38
      %44 = dma.hbm_to_vmem [thread:$0]  %s3, 4096, %s39, [#allocation5], 128, 128, 8
    $region17: #{actor_critic_forward.1} parent=1 // pred_fallthru
      _
    // Predicated region
    $region18: #{actor_critic_forward.1} parent=1 // pred_check
      _
    $region19: #{actor_critic_forward.1} parent=1 // pred_check_branch
      %46 = sbr.rel (0) target = $region21
    $region20: #{actor_critic_forward.1} parent=1 // pred_region
      _
    $region21: #{actor_critic_forward.1} parent=1 // pred_fallthru
      _
    // Predicated region
    $region22: #{actor_critic_forward.1} parent=1 // pred_check
      _
    $region23: #{actor_critic_forward.1} parent=1 // pred_check_branch
      %48 = sbr.rel (0) target = $region25
    $region24: #{actor_critic_forward.1} parent=1 // pred_region
      %s50 = ssub.s32 8192, 8192
      %51 = vsyncadd [#allocation5], %s50
      %s52 = sshll.u32 [#allocation6], 4
      %s53 = int_to_ptr.vmem [resolvable:$true] %s52
      %58 = dma.hbm_to_vmem [thread:$0]  %s5, 8192, %s53, [#allocation5], 256, 256, 16
    $region25: #{actor_critic_forward.1} parent=1 // pred_fallthru
      _
    // Predicated region
    $region26: #{actor_critic_forward.1} parent=1 // pred_check
      _
    $region27: #{actor_critic_forward.1} parent=1 // pred_check_branch
      %60 = sbr.rel (0) target = $region29
    $region28: #{actor_critic_forward.1} parent=1 // pred_region
      _
    $region29: #{actor_critic_forward.1} parent=1 // pred_fallthru
      _
    // Predicated region
    $region30: #{actor_critic_forward.1} parent=1 // pred_check
      _
    $region31: #{actor_critic_forward.1} parent=1 // pred_check_branch
      %62 = sbr.rel (0) target = $region33
    $region32: #{actor_critic_forward.1} parent=1 // pred_region
      %s64 = ssub.s32 4096, 4096
      %65 = vsyncadd [#allocation8], %s64
      %s66 = sshll.u32 [#allocation7], 4
      %s67 = int_to_ptr.vmem [resolvable:$true] %s66
      %72 = dma.hbm_to_vmem [thread:$0]  %s7, 4096, %s67, [#allocation8], 64, 64, 4
    $region33: #{actor_critic_forward.1} parent=1 // pred_fallthru
      _
    // Predicated region
    $region34: #{actor_critic_forward.1} parent=1 // pred_check
      _
    $region35: #{actor_critic_forward.1} parent=1 // pred_check_branch
      %74 = sbr.rel (0) target = $region37
    $region36: #{actor_critic_forward.1} parent=1 // pred_region
      _
    $region37: #{actor_critic_forward.1} parent=1 // pred_fallthru
      _
    // Predicated region
    $region38: #{actor_critic_forward.1} parent=1 // pred_check
      _
    $region39: #{actor_critic_forward.1} parent=1 // pred_check_branch
      %76 = sbr.rel (0) target = $region41
    $region40: #{actor_critic_forward.1} parent=1 // pred_region
      %77 = dma.done [#allocation3], 2048
    $region41: #{actor_critic_forward.1} parent=1 // pred_fallthru
      _
    // Predicated region
    $region42: #{actor_critic_forward.1} parent=1 // pred_check
      _
    $region43: #{actor_critic_forward.1} parent=1 // pred_check_branch
      %79 = sbr.rel (0) target = $region45
    $region44: #{actor_critic_forward.1} parent=1 // pred_region
      %80 = dma.done [#allocation5], 4096
    $region45: #{actor_critic_forward.1} parent=1 // pred_fallthru
      _
    // Predicated region
    $region46: #{actor_critic_forward.1} parent=1 // pred_check
      _
    $region47: #{actor_critic_forward.1} parent=1 // pred_check_branch
      %82 = sbr.rel (0) target = $region49
    $region48: #{actor_critic_forward.1} parent=1 // pred_region
      %83 = dma.done [#allocation5], 8192
    $region49: #{actor_critic_forward.1} parent=1 // pred_fallthru
      _
    // Predicated region
    $region50: #{actor_critic_forward.1} parent=1 // pred_check
      _
    $region51: #{actor_critic_forward.1} parent=1 // pred_check_branch
      %85 = sbr.rel (0) target = $region53
    $region52: #{actor_critic_forward.1} parent=1 // pred_region
      %86 = dma.done [#allocation8], 4096
    $region53: #{actor_critic_forward.1} parent=1 // pred_fallthru
      _
    %v88 = vld [vmem:[%s0] sm:$0xff]
    %v89 = vpack.c.bf16 %v88, %v88
    %v90 = vld [vmem:[#allocation2] sm:$0xff]
    %v91 = vld [vmem:[#allocation2 + $0x8] sm:$0xff]
    %v92 = vld [vmem:[#allocation2 + $0x10] sm:$0xff]
    %v93 = vld [vmem:[#allocation2 + $0x18] sm:$0xff]
    %v94 = vld [vmem:[#allocation2 + $0x20] sm:$0xff]
    %v95 = vld [vmem:[#allocation2 + $0x28] sm:$0xff]
    %v96 = vld [vmem:[#allocation2 + $0x30] sm:$0xff]
    %v97 = vld [vmem:[#allocation2 + $0x38] sm:$0xff]
    %v98 = vld [vmem:[#allocation2 + $0x40] sm:$0xff]
    %v99 = vld [vmem:[#allocation2 + $0x48] sm:$0xff]
    %v100 = vld [vmem:[#allocation2 + $0x50] sm:$0xff]
    %v101 = vld [vmem:[#allocation2 + $0x58] sm:$0xff]
    %v102 = vld [vmem:[#allocation2 + $0x60] sm:$0xff]
    %v103 = vld [vmem:[#allocation2 + $0x68] sm:$0xff]
    %v104 = vld [vmem:[#allocation2 + $0x70] sm:$0xff]
    %v105 = vld [vmem:[#allocation2 + $0x78] sm:$0xff]
    %v106 = vld [vmem:[%s2] sm:$0x3]
    %v108 = vlaneseq
    %v109 = vshrl.u32 %v108, 7
    %v110 = vsub.s32 0, %v109
    %v111 = vrot.slane %v106, %v110
    %v112 = vlaneseq
    %v113 = vshrl.u32 %v112, 7
    %v114 = vsub.s32 1, %v113
    %v115 = vrot.slane %v106, %v114
    %v134 = vunpack.c.l.b16 %v90
    %v135 = vunpack.c.h.b16 %v90
    %v136 = vunpack.c.l.b16 %v91
    %v137 = vunpack.c.h.b16 %v91
    %v138 = vunpack.c.l.b16 %v92
    %v139 = vunpack.c.h.b16 %v92
    %v140 = vunpack.c.l.b16 %v93
    %v141 = vunpack.c.h.b16 %v93
    %v142 = vunpack.c.l.b16 %v94
    %v143 = vunpack.c.h.b16 %v94
    %v144 = vunpack.c.l.b16 %v95
    %v145 = vunpack.c.h.b16 %v95
    %v146 = vunpack.c.l.b16 %v96
    %v147 = vunpack.c.h.b16 %v96
    %v148 = vunpack.c.l.b16 %v97
    %v149 = vunpack.c.h.b16 %v97
    %v150 = vunpack.c.l.b16 %v98
    %v151 = vunpack.c.h.b16 %v98
    %v152 = vunpack.c.l.b16 %v99
    %v153 = vunpack.c.h.b16 %v99
    %v154 = vunpack.c.l.b16 %v100
    %v155 = vunpack.c.h.b16 %v100
    %v156 = vunpack.c.l.b16 %v101
    %v157 = vunpack.c.h.b16 %v101
    %v158 = vunpack.c.l.b16 %v102
    %v159 = vunpack.c.h.b16 %v102
    %v160 = vunpack.c.l.b16 %v103
    %v161 = vunpack.c.h.b16 %v103
    %v162 = vunpack.c.l.b16 %v104
    %v163 = vunpack.c.h.b16 %v104
    %v164 = vunpack.c.l.b16 %v105
    %v165 = vunpack.c.h.b16 %v105
    %v166 = vpack.c.b16 %v136, %v134
    %v167 = vpack.c.b16 %v137, %v135
    %v168 = vpack.c.b16 %v140, %v138
    %v169 = vpack.c.b16 %v141, %v139
    %v170 = vpack.c.b16 %v144, %v142
    %v171 = vpack.c.b16 %v145, %v143
    %v172 = vpack.c.b16 %v148, %v146
    %v173 = vpack.c.b16 %v149, %v147
    %v174 = vpack.c.b16 %v152, %v150
    %v175 = vpack.c.b16 %v153, %v151
    %v176 = vpack.c.b16 %v156, %v154
    %v177 = vpack.c.b16 %v157, %v155
    %v178 = vpack.c.b16 %v160, %v158
    %v179 = vpack.c.b16 %v161, %v159
    %v180 = vpack.c.b16 %v164, %v162
    %v181 = vpack.c.b16 %v165, %v163
    %198 = vmatprep.subr.bf16.mxu0 %v181
    %199 = vmatpush1.bf16.msra.mxu0 %v180
    %200 = vmatprep.subr.bf16.mxu0 %v179
    %201 = vmatpush1.bf16.msra.mxu0 %v178
    %202 = vmatprep.subr.bf16.mxu0 %v177
    %203 = vmatpush1.bf16.msra.mxu0 %v176
    %204 = vmatprep.subr.bf16.mxu0 %v175
    %205 = vmatpush1.bf16.msra.mxu0 %v174
    %206 = vmatprep.subr.bf16.mxu0 %v173
    %207 = vmatpush1.bf16.msra.mxu0 %v172
    %208 = vmatprep.subr.bf16.mxu0 %v171
    %209 = vmatpush1.bf16.msra.mxu0 %v170
    %210 = vmatprep.subr.bf16.mxu0 %v169
    %211 = vmatpush1.bf16.msra.mxu0 %v168
    %212 = vmatprep.subr.bf16.mxu0 %v167
    %213 = vmatpush1.bf16.msra.mxu0 %v166
    %214 = vmatprep.subr.bf16.mxu0 0
    %215 = vmatpush2.bf16.msra.mxu0 0
    %216 = vmatprep.subr.bf16.mxu0 0
    %217 = vmatpush2.bf16.msra.mxu0 0
    %218 = vmatprep.subr.bf16.mxu0 0
    %219 = vmatpush2.bf16.msra.mxu0 0
    %220 = vmatprep.subr.bf16.mxu0 0
    %221 = vmatpush2.bf16.msra.mxu0 0
    %222 = vmatprep.subr.bf16.mxu0 0
    %223 = vmatpush2.bf16.msra.mxu0 0
    %224 = vmatprep.subr.bf16.mxu0 0
    %225 = vmatpush2.bf16.msra.mxu0 0
    %226 = vmatprep.subr.bf16.mxu0 0
    %227 = vmatpush2.bf16.msra.mxu0 0
    %228 = vmatprep.subr.bf16.mxu0 0
    %229 = vmatpush2.bf16.msra.mxu0 0
    %230 = vmatprep.mubr.bf16.mxu0 0
    %231 = vmatmul.mubr.bf16.gmra.mxu0 %v89
    %v232 = vpop.f32.mrf.mxu0
    %v233 = vadd.f32 %v111, %v232
    %v234 = vpop.f32.mrf.mxu0
    %v235 = vadd.f32 %v115, %v234
    %v236 = vpop.f32.mrf.mxu0
    %v237 = vpop.f32.mrf.mxu0
    %238 = vdwg.mxu0
    %v239 = vpack.c.bf16 %v233, %v233
    %v240 = vpack.c.bf16 %v235, %v235
    %v241 = vtanh.bf16.pop %v239
    %v242 = vtanh.bf16.pop %v240
    %v243 = vld [vmem:[#allocation4] sm:$0xff]
    %v244 = vld [vmem:[#allocation4 + $0x8] sm:$0xff]
    %v245 = vld [vmem:[#allocation4 + $0x10] sm:$0xff]
    %v246 = vld [vmem:[#allocation4 + $0x18] sm:$0xff]
    %v247 = vld [vmem:[#allocation4 + $0x20] sm:$0xff]
    %v248 = vld [vmem:[#allocation4 + $0x28] sm:$0xff]
    %v249 = vld [vmem:[#allocation4 + $0x30] sm:$0xff]
    %v250 = vld [vmem:[#allocation4 + $0x38] sm:$0xff]
    %v251 = vld [vmem:[#allocation4 + $0x40] sm:$0xff]
    %v252 = vld [vmem:[#allocation4 + $0x48] sm:$0xff]
    %v253 = vld [vmem:[#allocation4 + $0x50] sm:$0xff]
    %v254 = vld [vmem:[#allocation4 + $0x58] sm:$0xff]
    %v255 = vld [vmem:[#allocation4 + $0x60] sm:$0xff]
    %v256 = vld [vmem:[#allocation4 + $0x68] sm:$0xff]
    %v257 = vld [vmem:[#allocation4 + $0x70] sm:$0xff]
    %v258 = vld [vmem:[#allocation4 + $0x78] sm:$0xff]
    %v259 = vld [vmem:[#allocation4 + $0x80] sm:$0xff]
    %v260 = vld [vmem:[#allocation4 + $0x88] sm:$0xff]
    %v261 = vld [vmem:[#allocation4 + $0x90] sm:$0xff]
    %v262 = vld [vmem:[#allocation4 + $0x98] sm:$0xff]
    %v263 = vld [vmem:[#allocation4 + $0xa0] sm:$0xff]
    %v264 = vld [vmem:[#allocation4 + $0xa8] sm:$0xff]
    %v265 = vld [vmem:[#allocation4 + $0xb0] sm:$0xff]
    %v266 = vld [vmem:[#allocation4 + $0xb8] sm:$0xff]
    %v267 = vld [vmem:[#allocation4 + $0xc0] sm:$0xff]
    %v268 = vld [vmem:[#allocation4 + $0xc8] sm:$0xff]
    %v269 = vld [vmem:[#allocation4 + $0xd0] sm:$0xff]
    %v270 = vld [vmem:[#allocation4 + $0xd8] sm:$0xff]
    %v271 = vld [vmem:[#allocation4 + $0xe0] sm:$0xff]
    %v272 = vld [vmem:[#allocation4 + $0xe8] sm:$0xff]
    %v273 = vld [vmem:[#allocation4 + $0xf0] sm:$0xff]
    %v274 = vld [vmem:[#allocation4 + $0xf8] sm:$0xff]
    %v275 = vld [vmem:[%s4] sm:$0x3]
    %v277 = vlaneseq
    %v278 = vshrl.u32 %v277, 7
    %v279 = vsub.s32 0, %v278
    %v280 = vrot.slane %v275, %v279
    %v281 = vlaneseq
    %v282 = vshrl.u32 %v281, 7
    %v283 = vsub.s32 1, %v282
    %v284 = vrot.slane %v275, %v283
    %v319 = vunpack.c.l.b16 %v243
    %v320 = vunpack.c.h.b16 %v243
    %v321 = vunpack.c.l.b16 %v244
    %v322 = vunpack.c.h.b16 %v244
    %v323 = vunpack.c.l.b16 %v245
    %v324 = vunpack.c.h.b16 %v245
    %v325 = vunpack.c.l.b16 %v246
    %v326 = vunpack.c.h.b16 %v246
    %v327 = vunpack.c.l.b16 %v247
    %v328 = vunpack.c.h.b16 %v247
    %v329 = vunpack.c.l.b16 %v248
    %v330 = vunpack.c.h.b16 %v248
    %v331 = vunpack.c.l.b16 %v249
    %v332 = vunpack.c.h.b16 %v249
    %v333 = vunpack.c.l.b16 %v250
    %v334 = vunpack.c.h.b16 %v250
    %v335 = vunpack.c.l.b16 %v251
    %v336 = vunpack.c.h.b16 %v251
    %v337 = vunpack.c.l.b16 %v252
    %v338 = vunpack.c.h.b16 %v252
    %v339 = vunpack.c.l.b16 %v253
    %v340 = vunpack.c.h.b16 %v253
    %v341 = vunpack.c.l.b16 %v254
    %v342 = vunpack.c.h.b16 %v254
    %v343 = vunpack.c.l.b16 %v255
    %v344 = vunpack.c.h.b16 %v255
    %v345 = vunpack.c.l.b16 %v256
    %v346 = vunpack.c.h.b16 %v256
    %v347 = vunpack.c.l.b16 %v257
    %v348 = vunpack.c.h.b16 %v257
    %v349 = vunpack.c.l.b16 %v258
    %v350 = vunpack.c.h.b16 %v258
    %v351 = vunpack.c.l.b16 %v259
    %v352 = vunpack.c.h.b16 %v259
    %v353 = vunpack.c.l.b16 %v260
    %v354 = vunpack.c.h.b16 %v260
    %v355 = vunpack.c.l.b16 %v261
    %v356 = vunpack.c.h.b16 %v261
    %v357 = vunpack.c.l.b16 %v262
    %v358 = vunpack.c.h.b16 %v262
    %v359 = vunpack.c.l.b16 %v263
    %v360 = vunpack.c.h.b16 %v263
    %v361 = vunpack.c.l.b16 %v264
    %v362 = vunpack.c.h.b16 %v264
    %v363 = vunpack.c.l.b16 %v265
    %v364 = vunpack.c.h.b16 %v265
    %v365 = vunpack.c.l.b16 %v266
    %v366 = vunpack.c.h.b16 %v266
    %v367 = vunpack.c.l.b16 %v267
    %v368 = vunpack.c.h.b16 %v267
    %v369 = vunpack.c.l.b16 %v268
    %v370 = vunpack.c.h.b16 %v268
    %v371 = vunpack.c.l.b16 %v269
    %v372 = vunpack.c.h.b16 %v269
    %v373 = vunpack.c.l.b16 %v270
    %v374 = vunpack.c.h.b16 %v270
    %v375 = vunpack.c.l.b16 %v271
    %v376 = vunpack.c.h.b16 %v271
    %v377 = vunpack.c.l.b16 %v272
    %v378 = vunpack.c.h.b16 %v272
    %v379 = vunpack.c.l.b16 %v273
    %v380 = vunpack.c.h.b16 %v273
    %v381 = vunpack.c.l.b16 %v274
    %v382 = vunpack.c.h.b16 %v274
    %v383 = vpack.c.b16 %v321, %v319
    %v384 = vpack.c.b16 %v322, %v320
    %v385 = vpack.c.b16 %v325, %v323
    %v386 = vpack.c.b16 %v326, %v324
    %v387 = vpack.c.b16 %v329, %v327
    %v388 = vpack.c.b16 %v330, %v328
    %v389 = vpack.c.b16 %v333, %v331
    %v390 = vpack.c.b16 %v334, %v332
    %v391 = vpack.c.b16 %v337, %v335
    %v392 = vpack.c.b16 %v338, %v336
    %v393 = vpack.c.b16 %v341, %v339
    %v394 = vpack.c.b16 %v342, %v340
    %v395 = vpack.c.b16 %v345, %v343
    %v396 = vpack.c.b16 %v346, %v344
    %v397 = vpack.c.b16 %v349, %v347
    %v398 = vpack.c.b16 %v350, %v348
    %v399 = vpack.c.b16 %v353, %v351
    %v400 = vpack.c.b16 %v354, %v352
    %v401 = vpack.c.b16 %v357, %v355
    %v402 = vpack.c.b16 %v358, %v356
    %v403 = vpack.c.b16 %v361, %v359
    %v404 = vpack.c.b16 %v362, %v360
    %v405 = vpack.c.b16 %v365, %v363
    %v406 = vpack.c.b16 %v366, %v364
    %v407 = vpack.c.b16 %v369, %v367
    %v408 = vpack.c.b16 %v370, %v368
    %v409 = vpack.c.b16 %v373, %v371
    %v410 = vpack.c.b16 %v374, %v372
    %v411 = vpack.c.b16 %v377, %v375
    %v412 = vpack.c.b16 %v378, %v376
    %v413 = vpack.c.b16 %v381, %v379
    %v414 = vpack.c.b16 %v382, %v380
    %447 = vmatprep.subr.bf16.mxu0 %v398
    %448 = vmatpush1.bf16.msra.mxu0 %v397
    %449 = vmatprep.subr.bf16.mxu0 %v396
    %450 = vmatpush1.bf16.msra.mxu0 %v395
    %451 = vmatprep.subr.bf16.mxu0 %v394
    %452 = vmatpush1.bf16.msra.mxu0 %v393
    %453 = vmatprep.subr.bf16.mxu0 %v392
    %454 = vmatpush1.bf16.msra.mxu0 %v391
    %455 = vmatprep.subr.bf16.mxu0 %v390
    %456 = vmatpush1.bf16.msra.mxu0 %v389
    %457 = vmatprep.subr.bf16.mxu0 %v388
    %458 = vmatpush1.bf16.msra.mxu0 %v387
    %459 = vmatprep.subr.bf16.mxu0 %v386
    %460 = vmatpush1.bf16.msra.mxu0 %v385
    %461 = vmatprep.subr.bf16.mxu0 %v384
    %462 = vmatpush1.bf16.msra.mxu0 %v383
    %463 = vmatprep.subr.bf16.mxu0 %v414
    %464 = vmatpush2.bf16.msra.mxu0 %v413
    %465 = vmatprep.subr.bf16.mxu0 %v412
    %466 = vmatpush2.bf16.msra.mxu0 %v411
    %467 = vmatprep.subr.bf16.mxu0 %v410
    %468 = vmatpush2.bf16.msra.mxu0 %v409
    %469 = vmatprep.subr.bf16.mxu0 %v408
    %470 = vmatpush2.bf16.msra.mxu0 %v407
    %471 = vmatprep.subr.bf16.mxu0 %v406
    %472 = vmatpush2.bf16.msra.mxu0 %v405
    %473 = vmatprep.subr.bf16.mxu0 %v404
    %474 = vmatpush2.bf16.msra.mxu0 %v403
    %475 = vmatprep.subr.bf16.mxu0 %v402
    %476 = vmatpush2.bf16.msra.mxu0 %v401
    %477 = vmatprep.subr.bf16.mxu0 %v400
    %478 = vmatpush2.bf16.msra.mxu0 %v399
    %479 = vmatprep.mubr.bf16.mxu0 %v242
    %480 = vmatmul.mubr.bf16.gmra.mxu0 %v241
    %v481 = vpop.f32.mrf.mxu0
    %v482 = vadd.f32 %v280, %v481
    %v483 = vpop.f32.mrf.mxu0
    %v484 = vadd.f32 %v284, %v483
    %v485 = vpop.f32.mrf.mxu0
    %v486 = vpop.f32.mrf.mxu0
    %487 = vdwg.mxu0
    %v488 = vpack.c.bf16 %v482, %v482
    %v489 = vpack.c.bf16 %v484, %v484
    %v490 = vtanh.bf16.pop %v488
    %v491 = vtanh.bf16.pop %v489
    %v492 = vld [vmem:[#allocation6] sm:$0xff]
    %v493 = vld [vmem:[#allocation6 + $0x8] sm:$0xff]
    %v494 = vld [vmem:[#allocation6 + $0x10] sm:$0xff]
    %v495 = vld [vmem:[#allocation6 + $0x18] sm:$0xff]
    %v496 = vld [vmem:[#allocation6 + $0x20] sm:$0xff]
    %v497 = vld [vmem:[#allocation6 + $0x28] sm:$0xff]
    %v498 = vld [vmem:[#allocation6 + $0x30] sm:$0xff]
    %v499 = vld [vmem:[#allocation6 + $0x38] sm:$0xff]
    %v500 = vld [vmem:[#allocation6 + $0x40] sm:$0xff]
    %v501 = vld [vmem:[#allocation6 + $0x48] sm:$0xff]
    %v502 = vld [vmem:[#allocation6 + $0x50] sm:$0xff]
    %v503 = vld [vmem:[#allocation6 + $0x58] sm:$0xff]
    %v504 = vld [vmem:[#allocation6 + $0x60] sm:$0xff]
    %v505 = vld [vmem:[#allocation6 + $0x68] sm:$0xff]
    %v506 = vld [vmem:[#allocation6 + $0x70] sm:$0xff]
    %v507 = vld [vmem:[#allocation6 + $0x78] sm:$0xff]
    %v508 = vld [vmem:[#allocation6 + $0x80] sm:$0xff]
    %v509 = vld [vmem:[#allocation6 + $0x88] sm:$0xff]
    %v510 = vld [vmem:[#allocation6 + $0x90] sm:$0xff]
    %v511 = vld [vmem:[#allocation6 + $0x98] sm:$0xff]
    %v512 = vld [vmem:[#allocation6 + $0xa0] sm:$0xff]
    %v513 = vld [vmem:[#allocation6 + $0xa8] sm:$0xff]
    %v514 = vld [vmem:[#allocation6 + $0xb0] sm:$0xff]
    %v515 = vld [vmem:[#allocation6 + $0xb8] sm:$0xff]
    %v516 = vld [vmem:[#allocation6 + $0xc0] sm:$0xff]
    %v517 = vld [vmem:[#allocation6 + $0xc8] sm:$0xff]
    %v518 = vld [vmem:[#allocation6 + $0xd0] sm:$0xff]
    %v519 = vld [vmem:[#allocation6 + $0xd8] sm:$0xff]
    %v520 = vld [vmem:[#allocation6 + $0xe0] sm:$0xff]
    %v521 = vld [vmem:[#allocation6 + $0xe8] sm:$0xff]
    %v522 = vld [vmem:[#allocation6 + $0xf0] sm:$0xff]
    %v523 = vld [vmem:[#allocation6 + $0xf8] sm:$0xff]
    %v524 = vld [vmem:[#allocation6 + $0x100] sm:$0xff]
    %v525 = vld [vmem:[#allocation6 + $0x108] sm:$0xff]
    %v526 = vld [vmem:[#allocation6 + $0x110] sm:$0xff]
    %v527 = vld [vmem:[#allocation6 + $0x118] sm:$0xff]
    %v528 = vld [vmem:[#allocation6 + $0x120] sm:$0xff]
    %v529 = vld [vmem:[#allocation6 + $0x128] sm:$0xff]
    %v530 = vld [vmem:[#allocation6 + $0x130] sm:$0xff]
    %v531 = vld [vmem:[#allocation6 + $0x138] sm:$0xff]
    %v532 = vld [vmem:[#allocation6 + $0x140] sm:$0xff]
    %v533 = vld [vmem:[#allocation6 + $0x148] sm:$0xff]
    %v534 = vld [vmem:[#allocation6 + $0x150] sm:$0xff]
    %v535 = vld [vmem:[#allocation6 + $0x158] sm:$0xff]
    %v536 = vld [vmem:[#allocation6 + $0x160] sm:$0xff]
    %v537 = vld [vmem:[#allocation6 + $0x168] sm:$0xff]
    %v538 = vld [vmem:[#allocation6 + $0x170] sm:$0xff]
    %v539 = vld [vmem:[#allocation6 + $0x178] sm:$0xff]
    %v540 = vld [vmem:[#allocation6 + $0x180] sm:$0xff]
    %v541 = vld [vmem:[#allocation6 + $0x188] sm:$0xff]
    %v542 = vld [vmem:[#allocation6 + $0x190] sm:$0xff]
    %v543 = vld [vmem:[#allocation6 + $0x198] sm:$0xff]
    %v544 = vld [vmem:[#allocation6 + $0x1a0] sm:$0xff]
    %v545 = vld [vmem:[#allocation6 + $0x1a8] sm:$0xff]
    %v546 = vld [vmem:[#allocation6 + $0x1b0] sm:$0xff]
    %v547 = vld [vmem:[#allocation6 + $0x1b8] sm:$0xff]
    %v548 = vld [vmem:[#allocation6 + $0x1c0] sm:$0xff]
    %v549 = vld [vmem:[#allocation6 + $0x1c8] sm:$0xff]
    %v550 = vld [vmem:[#allocation6 + $0x1d0] sm:$0xff]
    %v551 = vld [vmem:[#allocation6 + $0x1d8] sm:$0xff]
    %v552 = vld [vmem:[#allocation6 + $0x1e0] sm:$0xff]
    %v553 = vld [vmem:[#allocation6 + $0x1e8] sm:$0xff]
    %v554 = vld [vmem:[#allocation6 + $0x1f0] sm:$0xff]
    %v555 = vld [vmem:[#allocation6 + $0x1f8] sm:$0xff]
    %v556 = vld [vmem:[%s6] sm:$0xf]
    %v558 = vlaneseq
    %v559 = vshrl.u32 %v558, 7
    %v560 = vsub.s32 0, %v559
    %v561 = vrot.slane %v556, %v560
    %v562 = vlaneseq
    %v563 = vshrl.u32 %v562, 7
    %v564 = vsub.s32 1, %v563
    %v565 = vrot.slane %v556, %v564
    %v566 = vlaneseq
    %v567 = vshrl.u32 %v566, 7
    %v568 = vsub.s32 2, %v567
    %v569 = vrot.slane %v556, %v568
    %v570 = vlaneseq
    %v571 = vshrl.u32 %v570, 7
    %v572 = vsub.s32 3, %v571
    %v573 = vrot.slane %v556, %v572
    %v642 = vunpack.c.l.b16 %v492
    %v643 = vunpack.c.h.b16 %v492
    %v644 = vunpack.c.l.b16 %v493
    %v645 = vunpack.c.h.b16 %v493
    %v646 = vunpack.c.l.b16 %v494
    %v647 = vunpack.c.h.b16 %v494
    %v648 = vunpack.c.l.b16 %v495
    %v649 = vunpack.c.h.b16 %v495
    %v650 = vunpack.c.l.b16 %v496
    %v651 = vunpack.c.h.b16 %v496
    %v652 = vunpack.c.l.b16 %v497
    %v653 = vunpack.c.h.b16 %v497
    %v654 = vunpack.c.l.b16 %v498
    %v655 = vunpack.c.h.b16 %v498
    %v656 = vunpack.c.l.b16 %v499
    %v657 = vunpack.c.h.b16 %v499
    %v658 = vunpack.c.l.b16 %v500
    %v659 = vunpack.c.h.b16 %v500
    %v660 = vunpack.c.l.b16 %v501
    %v661 = vunpack.c.h.b16 %v501
    %v662 = vunpack.c.l.b16 %v502
    %v663 = vunpack.c.h.b16 %v502
    %v664 = vunpack.c.l.b16 %v503
    %v665 = vunpack.c.h.b16 %v503
    %v666 = vunpack.c.l.b16 %v504
    %v667 = vunpack.c.h.b16 %v504
    %v668 = vunpack.c.l.b16 %v505
    %v669 = vunpack.c.h.b16 %v505
    %v670 = vunpack.c.l.b16 %v506
    %v671 = vunpack.c.h.b16 %v506
    %v672 = vunpack.c.l.b16 %v507
    %v673 = vunpack.c.h.b16 %v507
    %v674 = vunpack.c.l.b16 %v508
    %v675 = vunpack.c.h.b16 %v508
    %v676 = vunpack.c.l.b16 %v509
    %v677 = vunpack.c.h.b16 %v509
    %v678 = vunpack.c.l.b16 %v510
    %v679 = vunpack.c.h.b16 %v510
    %v680 = vunpack.c.l.b16 %v511
    %v681 = vunpack.c.h.b16 %v511
    %v682 = vunpack.c.l.b16 %v512
    %v683 = vunpack.c.h.b16 %v512
    %v684 = vunpack.c.l.b16 %v513
    %v685 = vunpack.c.h.b16 %v513
    %v686 = vunpack.c.l.b16 %v514
    %v687 = vunpack.c.h.b16 %v514
    %v688 = vunpack.c.l.b16 %v515
    %v689 = vunpack.c.h.b16 %v515
    %v690 = vunpack.c.l.b16 %v516
    %v691 = vunpack.c.h.b16 %v516
    %v692 = vunpack.c.l.b16 %v517
    %v693 = vunpack.c.h.b16 %v517
    %v694 = vunpack.c.l.b16 %v518
    %v695 = vunpack.c.h.b16 %v518
    %v696 = vunpack.c.l.b16 %v519
    %v697 = vunpack.c.h.b16 %v519
    %v698 = vunpack.c.l.b16 %v520
    %v699 = vunpack.c.h.b16 %v520
    %v700 = vunpack.c.l.b16 %v521
    %v701 = vunpack.c.h.b16 %v521
    %v702 = vunpack.c.l.b16 %v522
    %v703 = vunpack.c.h.b16 %v522
    %v704 = vunpack.c.l.b16 %v523
    %v705 = vunpack.c.h.b16 %v523
    %v706 = vunpack.c.l.b16 %v524
    %v707 = vunpack.c.h.b16 %v524
    %v708 = vunpack.c.l.b16 %v525
    %v709 = vunpack.c.h.b16 %v525
    %v710 = vunpack.c.l.b16 %v526
    %v711 = vunpack.c.h.b16 %v526
    %v712 = vunpack.c.l.b16 %v527
    %v713 = vunpack.c.h.b16 %v527
    %v714 = vunpack.c.l.b16 %v528
    %v715 = vunpack.c.h.b16 %v528
    %v716 = vunpack.c.l.b16 %v529
    %v717 = vunpack.c.h.b16 %v529
    %v718 = vunpack.c.l.b16 %v530
    %v719 = vunpack.c.h.b16 %v530
    %v720 = vunpack.c.l.b16 %v531
    %v721 = vunpack.c.h.b16 %v531
    %v722 = vunpack.c.l.b16 %v532
    %v723 = vunpack.c.h.b16 %v532
    %v724 = vunpack.c.l.b16 %v533
    %v725 = vunpack.c.h.b16 %v533
    %v726 = vunpack.c.l.b16 %v534
    %v727 = vunpack.c.h.b16 %v534
    %v728 = vunpack.c.l.b16 %v535
    %v729 = vunpack.c.h.b16 %v535
    %v730 = vunpack.c.l.b16 %v536
    %v731 = vunpack.c.h.b16 %v536
    %v732 = vunpack.c.l.b16 %v537
    %v733 = vunpack.c.h.b16 %v537
    %v734 = vunpack.c.l.b16 %v538
    %v735 = vunpack.c.h.b16 %v538
    %v736 = vunpack.c.l.b16 %v539
    %v737 = vunpack.c.h.b16 %v539
    %v738 = vunpack.c.l.b16 %v540
    %v739 = vunpack.c.h.b16 %v540
    %v740 = vunpack.c.l.b16 %v541
    %v741 = vunpack.c.h.b16 %v541
    %v742 = vunpack.c.l.b16 %v542
    %v743 = vunpack.c.h.b16 %v542
    %v744 = vunpack.c.l.b16 %v543
    %v745 = vunpack.c.h.b16 %v543
    %v746 = vunpack.c.l.b16 %v544
    %v747 = vunpack.c.h.b16 %v544
    %v748 = vunpack.c.l.b16 %v545
    %v749 = vunpack.c.h.b16 %v545
    %v750 = vunpack.c.l.b16 %v546
    %v751 = vunpack.c.h.b16 %v546
    %v752 = vunpack.c.l.b16 %v547
    %v753 = vunpack.c.h.b16 %v547
    %v754 = vunpack.c.l.b16 %v548
    %v755 = vunpack.c.h.b16 %v548
    %v756 = vunpack.c.l.b16 %v549
    %v757 = vunpack.c.h.b16 %v549
    %v758 = vunpack.c.l.b16 %v550
    %v759 = vunpack.c.h.b16 %v550
    %v760 = vunpack.c.l.b16 %v551
    %v761 = vunpack.c.h.b16 %v551
    %v762 = vunpack.c.l.b16 %v552
    %v763 = vunpack.c.h.b16 %v552
    %v764 = vunpack.c.l.b16 %v553
    %v765 = vunpack.c.h.b16 %v553
    %v766 = vunpack.c.l.b16 %v554
    %v767 = vunpack.c.h.b16 %v554
    %v768 = vunpack.c.l.b16 %v555
    %v769 = vunpack.c.h.b16 %v555
    %v770 = vpack.c.b16 %v646, %v642
    %v771 = vpack.c.b16 %v647, %v643
    %v772 = vpack.c.b16 %v648, %v644
    %v773 = vpack.c.b16 %v649, %v645
    %v774 = vpack.c.b16 %v654, %v650
    %v775 = vpack.c.b16 %v655, %v651
    %v776 = vpack.c.b16 %v656, %v652
    %v777 = vpack.c.b16 %v657, %v653
    %v778 = vpack.c.b16 %v662, %v658
    %v779 = vpack.c.b16 %v663, %v659
    %v780 = vpack.c.b16 %v664, %v660
    %v781 = vpack.c.b16 %v665, %v661
    %v782 = vpack.c.b16 %v670, %v666
    %v783 = vpack.c.b16 %v671, %v667
    %v784 = vpack.c.b16 %v672, %v668
    %v785 = vpack.c.b16 %v673, %v669
    %v786 = vpack.c.b16 %v678, %v674
    %v787 = vpack.c.b16 %v679, %v675
    %v788 = vpack.c.b16 %v680, %v676
    %v789 = vpack.c.b16 %v681, %v677
    %v790 = vpack.c.b16 %v686, %v682
    %v791 = vpack.c.b16 %v687, %v683
    %v792 = vpack.c.b16 %v688, %v684
    %v793 = vpack.c.b16 %v689, %v685
    %v794 = vpack.c.b16 %v694, %v690
    %v795 = vpack.c.b16 %v695, %v691
    %v796 = vpack.c.b16 %v696, %v692
    %v797 = vpack.c.b16 %v697, %v693
    %v798 = vpack.c.b16 %v702, %v698
    %v799 = vpack.c.b16 %v703, %v699
    %v800 = vpack.c.b16 %v704, %v700
    %v801 = vpack.c.b16 %v705, %v701
    %v802 = vpack.c.b16 %v710, %v706
    %v803 = vpack.c.b16 %v711, %v707
    %v804 = vpack.c.b16 %v712, %v708
    %v805 = vpack.c.b16 %v713, %v709
    %v806 = vpack.c.b16 %v718, %v714
    %v807 = vpack.c.b16 %v719, %v715
    %v808 = vpack.c.b16 %v720, %v716
    %v809 = vpack.c.b16 %v721, %v717
    %v810 = vpack.c.b16 %v726, %v722
    %v811 = vpack.c.b16 %v727, %v723
    %v812 = vpack.c.b16 %v728, %v724
    %v813 = vpack.c.b16 %v729, %v725
    %v814 = vpack.c.b16 %v734, %v730
    %v815 = vpack.c.b16 %v735, %v731
    %v816 = vpack.c.b16 %v736, %v732
    %v817 = vpack.c.b16 %v737, %v733
    %v818 = vpack.c.b16 %v742, %v738
    %v819 = vpack.c.b16 %v743, %v739
    %v820 = vpack.c.b16 %v744, %v740
    %v821 = vpack.c.b16 %v745, %v741
    %v822 = vpack.c.b16 %v750, %v746
    %v823 = vpack.c.b16 %v751, %v747
    %v824 = vpack.c.b16 %v752, %v748
    %v825 = vpack.c.b16 %v753, %v749
    %v826 = vpack.c.b16 %v758, %v754
    %v827 = vpack.c.b16 %v759, %v755
    %v828 = vpack.c.b16 %v760, %v756
    %v829 = vpack.c.b16 %v761, %v757
    %v830 = vpack.c.b16 %v766, %v762
    %v831 = vpack.c.b16 %v767, %v763
    %v832 = vpack.c.b16 %v768, %v764
    %v833 = vpack.c.b16 %v769, %v765
    %898 = vmatprep.subr.bf16.mxu0 %v799
    %899 = vmatpush1.bf16.msra.mxu0 %v798
    %900 = vmatprep.subr.bf16.mxu0 %v795
    %901 = vmatpush1.bf16.msra.mxu0 %v794
    %902 = vmatprep.subr.bf16.mxu0 %v791
    %903 = vmatpush1.bf16.msra.mxu0 %v790
    %904 = vmatprep.subr.bf16.mxu0 %v787
    %905 = vmatpush1.bf16.msra.mxu0 %v786
    %906 = vmatprep.subr.bf16.mxu0 %v783
    %907 = vmatpush1.bf16.msra.mxu0 %v782
    %908 = vmatprep.subr.bf16.mxu0 %v779
    %909 = vmatpush1.bf16.msra.mxu0 %v778
    %910 = vmatprep.subr.bf16.mxu0 %v775
    %911 = vmatpush1.bf16.msra.mxu0 %v774
    %912 = vmatprep.subr.bf16.mxu0 %v771
    %913 = vmatpush1.bf16.msra.mxu0 %v770
    %914 = vmatprep.subr.bf16.mxu0 %v831
    %915 = vmatpush2.bf16.msra.mxu0 %v830
    %916 = vmatprep.subr.bf16.mxu0 %v827
    %917 = vmatpush2.bf16.msra.mxu0 %v826
    %918 = vmatprep.subr.bf16.mxu0 %v823
    %919 = vmatpush2.bf16.msra.mxu0 %v822
    %920 = vmatprep.subr.bf16.mxu0 %v819
    %921 = vmatpush2.bf16.msra.mxu0 %v818
    %922 = vmatprep.subr.bf16.mxu0 %v815
    %923 = vmatpush2.bf16.msra.mxu0 %v814
    %924 = vmatprep.subr.bf16.mxu0 %v811
    %925 = vmatpush2.bf16.msra.mxu0 %v810
    %926 = vmatprep.subr.bf16.mxu0 %v807
    %927 = vmatpush2.bf16.msra.mxu0 %v806
    %928 = vmatprep.subr.bf16.mxu0 %v803
    %929 = vmatpush2.bf16.msra.mxu0 %v802
    %930 = vmatprep.mubr.bf16.mxu0 %v491
    %931 = vmatmul.mubr.bf16.gmra.mxu0 %v490
    %v932 = vpop.f32.mrf.mxu0
    %v933 = vadd.f32 %v561, %v932
    %v934 = vpop.f32.mrf.mxu0
    %v935 = vadd.f32 %v565, %v934
    %v936 = vpop.f32.mrf.mxu0
    %v937 = vpop.f32.mrf.mxu0
    %938 = vdwg.mxu0
    %939 = vmatprep.subr.bf16.mxu0 %v801
    %940 = vmatpush1.bf16.msra.mxu0 %v800
    %941 = vmatprep.subr.bf16.mxu0 %v797
    %942 = vmatpush1.bf16.msra.mxu0 %v796
    %943 = vmatprep.subr.bf16.mxu0 %v793
    %944 = vmatpush1.bf16.msra.mxu0 %v792
    %945 = vmatprep.subr.bf16.mxu0 %v789
    %946 = vmatpush1.bf16.msra.mxu0 %v788
    %947 = vmatprep.subr.bf16.mxu0 %v785
    %948 = vmatpush1.bf16.msra.mxu0 %v784
    %949 = vmatprep.subr.bf16.mxu0 %v781
    %950 = vmatpush1.bf16.msra.mxu0 %v780
    %951 = vmatprep.subr.bf16.mxu0 %v777
    %952 = vmatpush1.bf16.msra.mxu0 %v776
    %953 = vmatprep.subr.bf16.mxu0 %v773
    %954 = vmatpush1.bf16.msra.mxu0 %v772
    %955 = vmatprep.subr.bf16.mxu0 %v833
    %956 = vmatpush2.bf16.msra.mxu0 %v832
    %957 = vmatprep.subr.bf16.mxu0 %v829
    %958 = vmatpush2.bf16.msra.mxu0 %v828
    %959 = vmatprep.subr.bf16.mxu0 %v825
    %960 = vmatpush2.bf16.msra.mxu0 %v824
    %961 = vmatprep.subr.bf16.mxu0 %v821
    %962 = vmatpush2.bf16.msra.mxu0 %v820
    %963 = vmatprep.subr.bf16.mxu0 %v817
    %964 = vmatpush2.bf16.msra.mxu0 %v816
    %965 = vmatprep.subr.bf16.mxu0 %v813
    %966 = vmatpush2.bf16.msra.mxu0 %v812
    %967 = vmatprep.subr.bf16.mxu0 %v809
    %968 = vmatpush2.bf16.msra.mxu0 %v808
    %969 = vmatprep.subr.bf16.mxu0 %v805
    %970 = vmatpush2.bf16.msra.mxu0 %v804
    %971 = vmatprep.mubr.bf16.mxu0 %v491
    %972 = vmatmul.mubr.bf16.gmra.mxu0 %v490
    %v973 = vpop.f32.mrf.mxu0
    %v974 = vadd.f32 %v569, %v973
    %v975 = vpop.f32.mrf.mxu0
    %v976 = vadd.f32 %v573, %v975
    %v977 = vpop.f32.mrf.mxu0
    %v978 = vpop.f32.mrf.mxu0
    %979 = vdwg.mxu0
    %v980 = vpack.c.bf16 %v933, %v933
    %v981 = vpack.c.bf16 %v935, %v935
    %v982 = vpack.c.bf16 %v974, %v974
    %v983 = vpack.c.bf16 %v976, %v976
    %v984 = vtanh.bf16.pop %v980
    %v985 = vtanh.bf16.pop %v981
    %v986 = vtanh.bf16.pop %v982
    %v987 = vtanh.bf16.pop %v983
    %v988 = vld [vmem:[#allocation7] sm:$0xf]
    %v989 = vld [vmem:[#allocation7 + $0x4] sm:$0xf]
    %v990 = vld [vmem:[#allocation7 + $0x8] sm:$0xf]
    %v991 = vld [vmem:[#allocation7 + $0xc] sm:$0xf]
    %v992 = vld [vmem:[#allocation7 + $0x10] sm:$0xf]
    %v993 = vld [vmem:[#allocation7 + $0x14] sm:$0xf]
    %v994 = vld [vmem:[#allocation7 + $0x18] sm:$0xf]
    %v995 = vld [vmem:[#allocation7 + $0x1c] sm:$0xf]
    %v996 = vld [vmem:[#allocation7 + $0x20] sm:$0xf]
    %v997 = vld [vmem:[#allocation7 + $0x24] sm:$0xf]
    %v998 = vld [vmem:[#allocation7 + $0x28] sm:$0xf]
    %v999 = vld [vmem:[#allocation7 + $0x2c] sm:$0xf]
    %v1000 = vld [vmem:[#allocation7 + $0x30] sm:$0xf]
    %v1001 = vld [vmem:[#allocation7 + $0x34] sm:$0xf]
    %v1002 = vld [vmem:[#allocation7 + $0x38] sm:$0xf]
    %v1003 = vld [vmem:[#allocation7 + $0x3c] sm:$0xf]
    %v1004 = vld [vmem:[#allocation7 + $0x40] sm:$0xf]
    %v1005 = vld [vmem:[#allocation7 + $0x44] sm:$0xf]
    %v1006 = vld [vmem:[#allocation7 + $0x48] sm:$0xf]
    %v1007 = vld [vmem:[#allocation7 + $0x4c] sm:$0xf]
    %v1008 = vld [vmem:[#allocation7 + $0x50] sm:$0xf]
    %v1009 = vld [vmem:[#allocation7 + $0x54] sm:$0xf]
    %v1010 = vld [vmem:[#allocation7 + $0x58] sm:$0xf]
    %v1011 = vld [vmem:[#allocation7 + $0x5c] sm:$0xf]
    %v1012 = vld [vmem:[#allocation7 + $0x60] sm:$0xf]
    %v1013 = vld [vmem:[#allocation7 + $0x64] sm:$0xf]
    %v1014 = vld [vmem:[#allocation7 + $0x68] sm:$0xf]
    %v1015 = vld [vmem:[#allocation7 + $0x6c] sm:$0xf]
    %v1016 = vld [vmem:[#allocation7 + $0x70] sm:$0xf]
    %v1017 = vld [vmem:[#allocation7 + $0x74] sm:$0xf]
    %v1018 = vld [vmem:[#allocation7 + $0x78] sm:$0xf]
    %v1019 = vld [vmem:[#allocation7 + $0x7c] sm:$0xf]
    %v1020 = vld [vmem:[#allocation7 + $0x80] sm:$0xf]
    %v1021 = vld [vmem:[#allocation7 + $0x84] sm:$0xf]
    %v1022 = vld [vmem:[#allocation7 + $0x88] sm:$0xf]
    %v1023 = vld [vmem:[#allocation7 + $0x8c] sm:$0xf]
    %v1024 = vld [vmem:[#allocation7 + $0x90] sm:$0xf]
    %v1025 = vld [vmem:[#allocation7 + $0x94] sm:$0xf]
    %v1026 = vld [vmem:[#allocation7 + $0x98] sm:$0xf]
    %v1027 = vld [vmem:[#allocation7 + $0x9c] sm:$0xf]
    %v1028 = vld [vmem:[#allocation7 + $0xa0] sm:$0xf]
    %v1029 = vld [vmem:[#allocation7 + $0xa4] sm:$0xf]
    %v1030 = vld [vmem:[#allocation7 + $0xa8] sm:$0xf]
    %v1031 = vld [vmem:[#allocation7 + $0xac] sm:$0xf]
    %v1032 = vld [vmem:[#allocation7 + $0xb0] sm:$0xf]
    %v1033 = vld [vmem:[#allocation7 + $0xb4] sm:$0xf]
    %v1034 = vld [vmem:[#allocation7 + $0xb8] sm:$0xf]
    %v1035 = vld [vmem:[#allocation7 + $0xbc] sm:$0xf]
    %v1036 = vld [vmem:[#allocation7 + $0xc0] sm:$0xf]
    %v1037 = vld [vmem:[#allocation7 + $0xc4] sm:$0xf]
    %v1038 = vld [vmem:[#allocation7 + $0xc8] sm:$0xf]
    %v1039 = vld [vmem:[#allocation7 + $0xcc] sm:$0xf]
    %v1040 = vld [vmem:[#allocation7 + $0xd0] sm:$0xf]
    %v1041 = vld [vmem:[#allocation7 + $0xd4] sm:$0xf]
    %v1042 = vld [vmem:[#allocation7 + $0xd8] sm:$0xf]
    %v1043 = vld [vmem:[#allocation7 + $0xdc] sm:$0xf]
    %v1044 = vld [vmem:[#allocation7 + $0xe0] sm:$0xf]
    %v1045 = vld [vmem:[#allocation7 + $0xe4] sm:$0xf]
    %v1046 = vld [vmem:[#allocation7 + $0xe8] sm:$0xf]
    %v1047 = vld [vmem:[#allocation7 + $0xec] sm:$0xf]
    %v1048 = vld [vmem:[#allocation7 + $0xf0] sm:$0xf]
    %v1049 = vld [vmem:[#allocation7 + $0xf4] sm:$0xf]
    %v1050 = vld [vmem:[#allocation7 + $0xf8] sm:$0xf]
    %v1051 = vld [vmem:[#allocation7 + $0xfc] sm:$0xf]
    %v1052 = vld [vmem:[%s8] sm:$0x1]
    %v1054 = vlaneseq
    %v1055 = vshrl.u32 %v1054, 7
    %v1056 = vsub.s32 0, %v1055
    %v1057 = vrot.slane %v1052, %v1056
    %v1123 = vunpack.c.l.b16 %v988
    %v1124 = vunpack.c.l.b16 %v989
    %v1125 = vunpack.c.l.b16 %v990
    %v1126 = vunpack.c.l.b16 %v991
    %v1127 = vunpack.c.l.b16 %v992
    %v1128 = vunpack.c.l.b16 %v993
    %v1129 = vunpack.c.l.b16 %v994
    %v1130 = vunpack.c.l.b16 %v995
    %v1131 = vunpack.c.l.b16 %v996
    %v1132 = vunpack.c.l.b16 %v997
    %v1133 = vunpack.c.l.b16 %v998
    %v1134 = vunpack.c.l.b16 %v999
    %v1135 = vunpack.c.l.b16 %v1000
    %v1136 = vunpack.c.l.b16 %v1001
    %v1137 = vunpack.c.l.b16 %v1002
    %v1138 = vunpack.c.l.b16 %v1003
    %v1139 = vunpack.c.l.b16 %v1004
    %v1140 = vunpack.c.l.b16 %v1005
    %v1141 = vunpack.c.l.b16 %v1006
    %v1142 = vunpack.c.l.b16 %v1007
    %v1143 = vunpack.c.l.b16 %v1008
    %v1144 = vunpack.c.l.b16 %v1009
    %v1145 = vunpack.c.l.b16 %v1010
    %v1146 = vunpack.c.l.b16 %v1011
    %v1147 = vunpack.c.l.b16 %v1012
    %v1148 = vunpack.c.l.b16 %v1013
    %v1149 = vunpack.c.l.b16 %v1014
    %v1150 = vunpack.c.l.b16 %v1015
    %v1151 = vunpack.c.l.b16 %v1016
    %v1152 = vunpack.c.l.b16 %v1017
    %v1153 = vunpack.c.l.b16 %v1018
    %v1154 = vunpack.c.l.b16 %v1019
    %v1155 = vunpack.c.l.b16 %v1020
    %v1156 = vunpack.c.l.b16 %v1021
    %v1157 = vunpack.c.l.b16 %v1022
    %v1158 = vunpack.c.l.b16 %v1023
    %v1159 = vunpack.c.l.b16 %v1024
    %v1160 = vunpack.c.l.b16 %v1025
    %v1161 = vunpack.c.l.b16 %v1026
    %v1162 = vunpack.c.l.b16 %v1027
    %v1163 = vunpack.c.l.b16 %v1028
    %v1164 = vunpack.c.l.b16 %v1029
    %v1165 = vunpack.c.l.b16 %v1030
    %v1166 = vunpack.c.l.b16 %v1031
    %v1167 = vunpack.c.l.b16 %v1032
    %v1168 = vunpack.c.l.b16 %v1033
    %v1169 = vunpack.c.l.b16 %v1034
    %v1170 = vunpack.c.l.b16 %v1035
    %v1171 = vunpack.c.l.b16 %v1036
    %v1172 = vunpack.c.l.b16 %v1037
    %v1173 = vunpack.c.l.b16 %v1038
    %v1174 = vunpack.c.l.b16 %v1039
    %v1175 = vunpack.c.l.b16 %v1040
    %v1176 = vunpack.c.l.b16 %v1041
    %v1177 = vunpack.c.l.b16 %v1042
    %v1178 = vunpack.c.l.b16 %v1043
    %v1179 = vunpack.c.l.b16 %v1044
    %v1180 = vunpack.c.l.b16 %v1045
    %v1181 = vunpack.c.l.b16 %v1046
    %v1182 = vunpack.c.l.b16 %v1047
    %v1183 = vunpack.c.l.b16 %v1048
    %v1184 = vunpack.c.l.b16 %v1049
    %v1185 = vunpack.c.l.b16 %v1050
    %v1186 = vunpack.c.l.b16 %v1051
    %v1187 = vpack.c.b16 %v1124, %v1123
    %v1188 = vpack.c.b16 %v1126, %v1125
    %v1189 = vpack.c.b16 %v1128, %v1127
    %v1190 = vpack.c.b16 %v1130, %v1129
    %v1191 = vpack.c.b16 %v1132, %v1131
    %v1192 = vpack.c.b16 %v1134, %v1133
    %v1193 = vpack.c.b16 %v1136, %v1135
    %v1194 = vpack.c.b16 %v1138, %v1137
    %v1195 = vpack.c.b16 %v1140, %v1139
    %v1196 = vpack.c.b16 %v1142, %v1141
    %v1197 = vpack.c.b16 %v1144, %v1143
    %v1198 = vpack.c.b16 %v1146, %v1145
    %v1199 = vpack.c.b16 %v1148, %v1147
    %v1200 = vpack.c.b16 %v1150, %v1149
    %v1201 = vpack.c.b16 %v1152, %v1151
    %v1202 = vpack.c.b16 %v1154, %v1153
    %v1203 = vpack.c.b16 %v1156, %v1155
    %v1204 = vpack.c.b16 %v1158, %v1157
    %v1205 = vpack.c.b16 %v1160, %v1159
    %v1206 = vpack.c.b16 %v1162, %v1161
    %v1207 = vpack.c.b16 %v1164, %v1163
    %v1208 = vpack.c.b16 %v1166, %v1165
    %v1209 = vpack.c.b16 %v1168, %v1167
    %v1210 = vpack.c.b16 %v1170, %v1169
    %v1211 = vpack.c.b16 %v1172, %v1171
    %v1212 = vpack.c.b16 %v1174, %v1173
    %v1213 = vpack.c.b16 %v1176, %v1175
    %v1214 = vpack.c.b16 %v1178, %v1177
    %v1215 = vpack.c.b16 %v1180, %v1179
    %v1216 = vpack.c.b16 %v1182, %v1181
    %v1217 = vpack.c.b16 %v1184, %v1183
    %v1218 = vpack.c.b16 %v1186, %v1185
    %1251 = vmatprep.subr.bf16.mxu0 0
    %1252 = vmatpush1.bf16.msra.mxu0 %v1194
    %1253 = vmatprep.subr.bf16.mxu0 0
    %1254 = vmatpush1.bf16.msra.mxu0 %v1193
    %1255 = vmatprep.subr.bf16.mxu0 0
    %1256 = vmatpush1.bf16.msra.mxu0 %v1192
    %1257 = vmatprep.subr.bf16.mxu0 0
    %1258 = vmatpush1.bf16.msra.mxu0 %v1191
    %1259 = vmatprep.subr.bf16.mxu0 0
    %1260 = vmatpush1.bf16.msra.mxu0 %v1190
    %1261 = vmatprep.subr.bf16.mxu0 0
    %1262 = vmatpush1.bf16.msra.mxu0 %v1189
    %1263 = vmatprep.subr.bf16.mxu0 0
    %1264 = vmatpush1.bf16.msra.mxu0 %v1188
    %1265 = vmatprep.subr.bf16.mxu0 0
    %1266 = vmatpush1.bf16.msra.mxu0 %v1187
    %1267 = vmatprep.subr.bf16.mxu0 0
    %1268 = vmatpush2.bf16.msra.mxu0 %v1202
    %1269 = vmatprep.subr.bf16.mxu0 0
    %1270 = vmatpush2.bf16.msra.mxu0 %v1201
    %1271 = vmatprep.subr.bf16.mxu0 0
    %1272 = vmatpush2.bf16.msra.mxu0 %v1200
    %1273 = vmatprep.subr.bf16.mxu0 0
    %1274 = vmatpush2.bf16.msra.mxu0 %v1199
    %1275 = vmatprep.subr.bf16.mxu0 0
    %1276 = vmatpush2.bf16.msra.mxu0 %v1198
    %1277 = vmatprep.subr.bf16.mxu0 0
    %1278 = vmatpush2.bf16.msra.mxu0 %v1197
    %1279 = vmatprep.subr.bf16.mxu0 0
    %1280 = vmatpush2.bf16.msra.mxu0 %v1196
    %1281 = vmatprep.subr.bf16.mxu0 0
    %1282 = vmatpush2.bf16.msra.mxu0 %v1195
    %1283 = vmatprep.mubr.bf16.mxu0 %v985
    %1284 = vmatmul.mubr.bf16.gmra.mxu0 %v984
    %v1285 = vpop.f32.mrf.mxu0
    %v1286 = vadd.f32 %v1057, %v1285
    %v1287 = vpop.f32.mrf.mxu0
    %v1288 = vpop.f32.mrf.mxu0
    %v1289 = vpop.f32.mrf.mxu0
    %1290 = vdwg.mxu0
    %1291 = vmatprep.subr.bf16.mxu0 0
    %1292 = vmatpush1.bf16.msra.mxu0 %v1210
    %1293 = vmatprep.subr.bf16.mxu0 0
    %1294 = vmatpush1.bf16.msra.mxu0 %v1209
    %1295 = vmatprep.subr.bf16.mxu0 0
    %1296 = vmatpush1.bf16.msra.mxu0 %v1208
    %1297 = vmatprep.subr.bf16.mxu0 0
    %1298 = vmatpush1.bf16.msra.mxu0 %v1207
    %1299 = vmatprep.subr.bf16.mxu0 0
    %1300 = vmatpush1.bf16.msra.mxu0 %v1206
    %1301 = vmatprep.subr.bf16.mxu0 0
    %1302 = vmatpush1.bf16.msra.mxu0 %v1205
    %1303 = vmatprep.subr.bf16.mxu0 0
    %1304 = vmatpush1.bf16.msra.mxu0 %v1204
    %1305 = vmatprep.subr.bf16.mxu0 0
    %1306 = vmatpush1.bf16.msra.mxu0 %v1203
    %1307 = vmatprep.subr.bf16.mxu0 0
    %1308 = vmatpush2.bf16.msra.mxu0 %v1218
    %1309 = vmatprep.subr.bf16.mxu0 0
    %1310 = vmatpush2.bf16.msra.mxu0 %v1217
    %1311 = vmatprep.subr.bf16.mxu0 0
    %1312 = vmatpush2.bf16.msra.mxu0 %v1216
    %1313 = vmatprep.subr.bf16.mxu0 0
    %1314 = vmatpush2.bf16.msra.mxu0 %v1215
    %1315 = vmatprep.subr.bf16.mxu0 0
    %1316 = vmatpush2.bf16.msra.mxu0 %v1214
    %1317 = vmatprep.subr.bf16.mxu0 0
    %1318 = vmatpush2.bf16.msra.mxu0 %v1213
    %1319 = vmatprep.subr.bf16.mxu0 0
    %1320 = vmatpush2.bf16.msra.mxu0 %v1212
    %1321 = vmatprep.subr.bf16.mxu0 0
    %1322 = vmatpush2.bf16.msra.mxu0 %v1211
    %1323 = vmatprep.mubr.bf16.mxu0 %v987
    %1324 = vmatmul.mubr.bf16.gmra.mxu0 %v986
    %v1325 = vpop.f32.mrf.mxu0
    %v1326 = vadd.f32 %v1286, %v1325
    %v1327 = vpop.f32.mrf.mxu0
    %v1328 = vpop.f32.mrf.mxu0
    %v1329 = vpop.f32.mrf.mxu0
    %1330 = vdwg.mxu0
    %1331 = vst [vmem:[%s9] sm:$0xff] %v1326
    // Predicated region
    $region54: #{actor_critic_forward.1} parent=1 // pred_check
      _
    $region55: #{actor_critic_forward.1} parent=1 // pred_check_branch
      %1333 = sbr.rel (0) target = $region57
    $region56: #{actor_critic_forward.1} parent=1 // pred_region
      _
    $region57: #{actor_critic_forward.1} parent=1 // pred_fallthru
      _
    // Predicated region
    $region58: #{actor_critic_forward.1} parent=1 // pred_check
      _
    $region59: #{actor_critic_forward.1} parent=1 // pred_check_branch
      %1335 = sbr.rel (0) target = $region61
    $region60: #{actor_critic_forward.1} parent=1 // pred_region
      _
    $region61: #{actor_critic_forward.1} parent=1 // pred_fallthru
      _
    %1336 = vsyncpa [#allocation3], 1
    %1337 = vsyncpa [#allocation5], 1
    %1338 = vsyncpa [#allocation8], 1

</llo_original>
